<compile_context>
chip_gen: v7x
topology: tpu7x:2x2x1
jax: 0.10.0
libtpu: 0.0.40
codegen_flags: <defaults>
</compile_context>

<pallas_src>
import jax
import jax.numpy as jnp
from jax.experimental import pallas as pl
from jax.experimental.pallas import tpu as pltpu


_LANE = 128     # lane width: feature dims padded to multiples of this
_SUBLANE = 8    # sublane width: batch tiles must be multiples of this


def _round_up(n, m):
    return ((n + m - 1) // m) * m


def _pad2(a, rows, cols):
    r, c = a.shape
    if r == rows and c == cols:
        return a
    return jnp.pad(a, ((0, rows - r), (0, cols - c)))


def _stable_sigmoid(x):
    # Numerically-stable sigmoid using only exp / where / divide (all Mosaic-supported).
    e = jnp.exp(-jnp.abs(x))
    return jnp.where(x >= 0, 1.0 / (1.0 + e), e / (1.0 + e))


def _make_kernel(binary, use_bf16_matmul):
    mm_dtype = jnp.bfloat16 if use_bf16_matmul else jnp.float32

    def _dot(a, w_ref):
        return jnp.dot(a.astype(mm_dtype), w_ref[...].astype(mm_dtype),
                       preferred_element_type=jnp.float32)

    def kernel(x_ref,
               w1_ref, b1_ref, w2_ref, b2_ref,
               w3_ref, b3_ref, w4_ref, b4_ref,
               recon_ref, z_ref):
        x = x_ref[...]

        # ---- encode ----
        h = jnp.maximum(_dot(x, w1_ref) + b1_ref[...], 0.0)
        z_logits = _dot(h, w2_ref) + b2_ref[...]
        if binary:
            # sigmoid(u) > 0.5 <=> u > 0 (exact, incl. u == 0); skips exp/divide/compare.
            z = (z_logits > 0.0).astype(jnp.float32)
        else:
            z = _stable_sigmoid(z_logits)
        z_ref[...] = z

        # ---- decode ----
        h = jnp.maximum(_dot(z, w3_ref) + b3_ref[...], 0.0)
        recon_ref[...] = _stable_sigmoid(_dot(h, w4_ref) + b4_ref[...])

    return kernel


def binary_autoencoder_forward(x, params, *, binary=True, batch_tile=256,
                               use_bf16_matmul=False):
    """x: [B, input_dim] f32. params: [(W,b)]*4 with W:[in,out], b:[1,out] (fc1..fc4)."""
    (w1, b1), (w2, b2), (w3, b3), (w4, b4) = params
    B, input_dim = x.shape
    hidden_dim = w1.shape[1]
    latent_dim = w2.shape[1]     # correct: fc2's output dim is the latent size

    # Lane-pad feature dims; tile the batch.
    Dp = _round_up(input_dim, _LANE)
    Hp = _round_up(hidden_dim, _LANE)
    Lp = _round_up(latent_dim, _LANE)

    TB = min(_round_up(batch_tile, _SUBLANE), _round_up(B, _SUBLANE))
    Bp = _round_up(B, TB)
    grid = (Bp // TB,)

    xp = _pad2(x.astype(jnp.float32), Bp, Dp)
    w1p, b1p = _pad2(w1, Dp, Hp), _pad2(b1, 1, Hp)
    w2p, b2p = _pad2(w2, Hp, Lp), _pad2(b2, 1, Lp)
    w3p, b3p = _pad2(w3, Lp, Hp), _pad2(b3, 1, Hp)
    w4p, b4p = _pad2(w4, Hp, Dp), _pad2(b4, 1, Dp)

    def batch_spec(shape):   # pipelined over the batch grid axis
        return pl.BlockSpec(shape, lambda i: (i, 0))

    def const_spec(shape):   # VMEM-resident across all grid iterations
        return pl.BlockSpec(shape, lambda i: (0, 0))

    in_specs = [
        batch_spec((TB, Dp)),                        # x tile
        const_spec((Dp, Hp)), const_spec((1, Hp)),   # fc1
        const_spec((Hp, Lp)), const_spec((1, Lp)),   # fc2
        const_spec((Lp, Hp)), const_spec((1, Hp)),   # fc3
        const_spec((Hp, Dp)), const_spec((1, Dp)),   # fc4
    ]
    out_specs = (
        batch_spec((TB, Dp)),   # recon tile
        batch_spec((TB, Lp)),   # z tile
    )

    # Advisory cost hint for the XLA scheduler.
    flops = 2 * Bp * (Dp * Hp + Hp * Lp + Lp * Hp + Hp * Dp)
    transcendentals = Bp * Dp + (0 if binary else Bp * Lp)
    bytes_accessed = 4 * (Bp * Dp            # x
                          + Bp * Dp + Bp * Lp          # recon + z
                          + 2 * Dp * Hp + 2 * Hp * Lp  # weights
                          + 2 * Hp + Lp + Dp)          # biases
    cost = pl.CostEstimate(flops=int(flops),
                           transcendentals=int(transcendentals),
                           bytes_accessed=int(bytes_accessed))

    # VMEM budget: resident weights/biases + double-buffered x/recon/z tiles + live
    # intermediates, with 2x headroom; capped at 64 MiB so it also fits v7x.
    weight_bytes = 4 * (2 * Dp * Hp + 2 * Hp * Lp + 2 * Hp + Lp + Dp)
    tile_bytes = 4 * 2 * TB * (2 * Dp + Lp)
    scratch_bytes = 4 * TB * (2 * Hp + Lp + Dp)
    need = weight_bytes + tile_bytes + scratch_bytes
    vmem_limit = int(min(64 * 2**20, max(32 * 2**20, 2 * need)))

    kernel = _make_kernel(binary, use_bf16_matmul)

    recon_p, z_p = pl.pallas_call(
        kernel,
        out_shape=(
            jax.ShapeDtypeStruct((Bp, Dp), jnp.float32),
            jax.ShapeDtypeStruct((Bp, Lp), jnp.float32),
        ),
        grid_spec=pltpu.PrefetchScalarGridSpec(
            num_scalar_prefetch=0,
            grid=grid,
            in_specs=in_specs,
            out_specs=out_specs,
        ),
        compiler_params=pltpu.CompilerParams(
            dimension_semantics=("parallel",),   # shards batch tiles across TCs on v7x
            vmem_limit_bytes=vmem_limit,
        ),
        cost_estimate=cost,
    )(xp, w1p, b1p, w2p, b2p, w3p, b3p, w4p, b4p)

    return recon_p[:B, :input_dim], z_p[:B, :latent_dim]


def init_params(key, input_dim, hidden_dim, latent_dim):
    """Deterministic init mirroring nn.Linear shapes; weights stored as [in, out]."""
    dims = [
        (input_dim, hidden_dim),   # fc1
        (hidden_dim, latent_dim),  # fc2
        (latent_dim, hidden_dim),  # fc3
        (hidden_dim, input_dim),   # fc4
    ]
    params = []
    for fan_in, fan_out in dims:
        key, kw, kb = jax.random.split(key, 3)
        bound = 1.0 / jnp.sqrt(fan_in)
        w = jax.random.uniform(kw, (fan_in, fan_out), jnp.float32, -bound, bound)
        b = jax.random.uniform(kb, (1, fan_out), jnp.float32, -bound, bound)
        params.append((w, b))
    return params


def reference_forward(x, params, binary=True):
    """Plain-JAX reference with the module's semantics."""
    (w1, b1), (w2, b2), (w3, b3), (w4, b4) = params
    h = jax.nn.relu(x @ w1 + b1)
    z = jax.nn.sigmoid(h @ w2 + b2)
    if binary:
        z = (z > 0.5).astype(jnp.float32)
    h = jax.nn.relu(z @ w3 + b3)
    recon = jax.nn.sigmoid(h @ w4 + b4)
    return recon, z


if __name__ == "__main__":
    # Small shapes consistent with the module: batch=8, input_dim=16,
    # hidden_dim=32, latent_dim=8.
    B, INPUT_DIM, HIDDEN_DIM, LATENT_DIM = 8, 16, 32, 8

    key = jax.random.PRNGKey(0)
    key, kx = jax.random.split(key)
    x = jax.random.uniform(kx, (B, INPUT_DIM), jnp.float32)

    params = init_params(key, INPUT_DIM, HIDDEN_DIM, LATENT_DIM)

    recon, z = binary_autoencoder_forward(x, params)
    recon = jax.block_until_ready(recon)
    z = jax.block_until_ready(z)

    recon_ref, z_ref = reference_forward(x, params)
    assert recon.shape == (B, INPUT_DIM) and z.shape == (B, LATENT_DIM)
    assert jnp.allclose(recon, recon_ref, atol=1e-5), "recon mismatch"
    assert jnp.allclose(z, z_ref, atol=1e-5), "latent mismatch"

    print("KERNEL_OK")
</pallas_src>

<mosaic_0001>
module attributes {stable_mosaic.version = 11 : i64} {
  func.func @kernel(%arg0: i32, %arg1: memref<8x128xf32, #tpu.memory_space<vmem>>, %arg2: memref<128x128xf32, #tpu.memory_space<vmem>>, %arg3: memref<1x128xf32, #tpu.memory_space<vmem>>, %arg4: memref<128x128xf32, #tpu.memory_space<vmem>>, %arg5: memref<1x128xf32, #tpu.memory_space<vmem>>, %arg6: memref<128x128xf32, #tpu.memory_space<vmem>>, %arg7: memref<1x128xf32, #tpu.memory_space<vmem>>, %arg8: memref<128x128xf32, #tpu.memory_space<vmem>>, %arg9: memref<1x128xf32, #tpu.memory_space<vmem>>, %arg10: memref<8x128xf32, #tpu.memory_space<vmem>>, %arg11: memref<8x128xf32, #tpu.memory_space<vmem>>) attributes {dimension_semantics = [#tpu.dimension_semantics<parallel>], iteration_bounds = array<i64: 1>, scalar_prefetch = 0 : i64, scratch_operands = 0 : i64, tpu.core_type = #tpu.core_type<tc>, window_params = [{transform_indices = @transform_0, window_bounds = array<i64: 8, 128>}, {pipeline_mode = #tpu.pipeline_mode<synchronous>, transform_indices = @transform_1, window_bounds = array<i64: 128, 128>}, {pipeline_mode = #tpu.pipeline_mode<synchronous>, transform_indices = @transform_2, window_bounds = array<i64: 1, 128>}, {pipeline_mode = #tpu.pipeline_mode<synchronous>, transform_indices = @transform_3, window_bounds = array<i64: 128, 128>}, {pipeline_mode = #tpu.pipeline_mode<synchronous>, transform_indices = @transform_4, window_bounds = array<i64: 1, 128>}, {pipeline_mode = #tpu.pipeline_mode<synchronous>, transform_indices = @transform_5, window_bounds = array<i64: 128, 128>}, {pipeline_mode = #tpu.pipeline_mode<synchronous>, transform_indices = @transform_6, window_bounds = array<i64: 1, 128>}, {pipeline_mode = #tpu.pipeline_mode<synchronous>, transform_indices = @transform_7, window_bounds = array<i64: 128, 128>}, {pipeline_mode = #tpu.pipeline_mode<synchronous>, transform_indices = @transform_8, window_bounds = array<i64: 1, 128>}, {transform_indices = @transform_9, window_bounds = array<i64: 8, 128>}, {transform_indices = @transform_10, window_bounds = array<i64: 8, 128>}]} {
    %c0 = arith.constant 0 : index
    %c0_0 = arith.constant 0 : index
    %0 = vector.load %arg1[%c0, %c0_0] : memref<8x128xf32, #tpu.memory_space<vmem>>, vector<8x128xf32>
    %c0_1 = arith.constant 0 : index
    %c0_2 = arith.constant 0 : index
    %1 = vector.load %arg2[%c0_1, %c0_2] : memref<128x128xf32, #tpu.memory_space<vmem>>, vector<128x128xf32>
    %cst = arith.constant dense<0.000000e+00> : vector<8x128xf32>
    %2 = tpu.matmul %0, %1, %cst {dimension_numbers = #tpu.dot_dimension_numbers<[1], [0], [0], [1], [0, 0, 1, 1], [], []>} : vector<8x128xf32>, vector<128x128xf32>, vector<8x128xf32> -> vector<8x128xf32>
    %c0_3 = arith.constant 0 : index
    %c0_4 = arith.constant 0 : index
    %3 = vector.load %arg3[%c0_3, %c0_4] : memref<1x128xf32, #tpu.memory_space<vmem>>, vector<1x128xf32>
    %4 = vector.broadcast %3 : vector<1x128xf32> to vector<8x128xf32>
    %5 = arith.addf %2, %4 : vector<8x128xf32>
    %cst_5 = arith.constant 0.000000e+00 : f32
    %6 = vector.broadcast %cst_5 : f32 to vector<8x128xf32>
    %7 = arith.maximumf %5, %6 : vector<8x128xf32>
    %c0_6 = arith.constant 0 : index
    %c0_7 = arith.constant 0 : index
    %8 = vector.load %arg4[%c0_6, %c0_7] : memref<128x128xf32, #tpu.memory_space<vmem>>, vector<128x128xf32>
    %cst_8 = arith.constant dense<0.000000e+00> : vector<8x128xf32>
    %9 = tpu.matmul %7, %8, %cst_8 {dimension_numbers = #tpu.dot_dimension_numbers<[1], [0], [0], [1], [0, 0, 1, 1], [], []>} : vector<8x128xf32>, vector<128x128xf32>, vector<8x128xf32> -> vector<8x128xf32>
    %c0_9 = arith.constant 0 : index
    %c0_10 = arith.constant 0 : index
    %10 = vector.load %arg5[%c0_9, %c0_10] : memref<1x128xf32, #tpu.memory_space<vmem>>, vector<1x128xf32>
    %11 = vector.broadcast %10 : vector<1x128xf32> to vector<8x128xf32>
    %12 = arith.addf %9, %11 : vector<8x128xf32>
    %cst_11 = arith.constant 0.000000e+00 : f32
    %13 = vector.broadcast %cst_11 : f32 to vector<8x128xf32>
    %14 = arith.cmpf ogt, %12, %13 : vector<8x128xf32>
    %15 = arith.extui %14 : vector<8x128xi1> to vector<8x128xi32>
    %16 = arith.sitofp %15 : vector<8x128xi32> to vector<8x128xf32>
    %c0_12 = arith.constant 0 : index
    %c0_13 = arith.constant 0 : index
    %17 = vector.load %arg11[%c0_12, %c0_13] : memref<8x128xf32, #tpu.memory_space<vmem>>, vector<8x128xf32>
    tpu.vector_store %arg11[%c0_12, %c0_13], %16 {strides = array<i32>} : memref<8x128xf32, #tpu.memory_space<vmem>>, vector<8x128xf32>,
    %c0_14 = arith.constant 0 : index
    %c0_15 = arith.constant 0 : index
    %18 = vector.load %arg6[%c0_14, %c0_15] : memref<128x128xf32, #tpu.memory_space<vmem>>, vector<128x128xf32>
    %cst_16 = arith.constant dense<0.000000e+00> : vector<8x128xf32>
    %19 = tpu.matmul %16, %18, %cst_16 {dimension_numbers = #tpu.dot_dimension_numbers<[1], [0], [0], [1], [0, 0, 1, 1], [], []>} : vector<8x128xf32>, vector<128x128xf32>, vector<8x128xf32> -> vector<8x128xf32>
    %c0_17 = arith.constant 0 : index
    %c0_18 = arith.constant 0 : index
    %20 = vector.load %arg7[%c0_17, %c0_18] : memref<1x128xf32, #tpu.memory_space<vmem>>, vector<1x128xf32>
    %21 = vector.broadcast %20 : vector<1x128xf32> to vector<8x128xf32>
    %22 = arith.addf %19, %21 : vector<8x128xf32>
    %cst_19 = arith.constant 0.000000e+00 : f32
    %23 = vector.broadcast %cst_19 : f32 to vector<8x128xf32>
    %24 = arith.maximumf %22, %23 : vector<8x128xf32>
    %c0_20 = arith.constant 0 : index
    %c0_21 = arith.constant 0 : index
    %25 = vector.load %arg8[%c0_20, %c0_21] : memref<128x128xf32, #tpu.memory_space<vmem>>, vector<128x128xf32>
    %cst_22 = arith.constant dense<0.000000e+00> : vector<8x128xf32>
    %26 = tpu.matmul %24, %25, %cst_22 {dimension_numbers = #tpu.dot_dimension_numbers<[1], [0], [0], [1], [0, 0, 1, 1], [], []>} : vector<8x128xf32>, vector<128x128xf32>, vector<8x128xf32> -> vector<8x128xf32>
    %c0_23 = arith.constant 0 : index
    %c0_24 = arith.constant 0 : index
    %27 = vector.load %arg9[%c0_23, %c0_24] : memref<1x128xf32, #tpu.memory_space<vmem>>, vector<1x128xf32>
    %28 = vector.broadcast %27 : vector<1x128xf32> to vector<8x128xf32>
    %29 = arith.addf %26, %28 : vector<8x128xf32>
    %30 = math.absf %29 : vector<8x128xf32>
    %cst_25 = arith.constant 0.000000e+00 : f32
    %31 = vector.broadcast %cst_25 : f32 to vector<8x128xf32>
    %32 = arith.subf %31, %30 : vector<8x128xf32>
    %33 = math.exp %32 : vector<8x128xf32>
    %cst_26 = arith.constant 0.000000e+00 : f32
    %34 = vector.broadcast %cst_26 : f32 to vector<8x128xf32>
    %35 = arith.cmpf oge, %29, %34 : vector<8x128xf32>
    %cst_27 = arith.constant 1.000000e+00 : f32
    %36 = vector.broadcast %cst_27 : f32 to vector<8x128xf32>
    %37 = arith.addf %36, %33 : vector<8x128xf32>
    %cst_28 = arith.constant 1.000000e+00 : f32
    %38 = vector.broadcast %cst_28 : f32 to vector<8x128xf32>
    %39 = arith.divf %38, %37 : vector<8x128xf32>
    %cst_29 = arith.constant 1.000000e+00 : f32
    %40 = vector.broadcast %cst_29 : f32 to vector<8x128xf32>
    %41 = arith.addf %40, %33 : vector<8x128xf32>
    %42 = arith.divf %33, %41 : vector<8x128xf32>
    %43 = arith.select %35, %39, %42 : vector<8x128xi1>, vector<8x128xf32>
    %c0_30 = arith.constant 0 : index
    %c0_31 = arith.constant 0 : index
    %44 = vector.load %arg10[%c0_30, %c0_31] : memref<8x128xf32, #tpu.memory_space<vmem>>, vector<8x128xf32>
    tpu.vector_store %arg10[%c0_30, %c0_31], %43 {strides = array<i32>} : memref<8x128xf32, #tpu.memory_space<vmem>>, vector<8x128xf32>,
    return
  }
  func.func @transform_0(%arg0: i32) -> (i32, i32) {
    %c0_i32 = arith.constant 0 : i32
    %c0_i32_0 = arith.constant 0 : i32
    return %arg0, %c0_i32 : i32, i32
  }
  func.func @transform_1(%arg0: i32) -> (i32, i32) {
    %c0_i32 = arith.constant 0 : i32
    %c0_i32_0 = arith.constant 0 : i32
    %c0_i32_1 = arith.constant 0 : i32
    return %c0_i32, %c0_i32_0 : i32, i32
  }
  func.func @transform_2(%arg0: i32) -> (i32, i32) {
    %c0_i32 = arith.constant 0 : i32
    %c0_i32_0 = arith.constant 0 : i32
    %c0_i32_1 = arith.constant 0 : i32
    return %c0_i32, %c0_i32_0 : i32, i32
  }
  func.func @transform_3(%arg0: i32) -> (i32, i32) {
    %c0_i32 = arith.constant 0 : i32
    %c0_i32_0 = arith.constant 0 : i32
    %c0_i32_1 = arith.constant 0 : i32
    return %c0_i32, %c0_i32_0 : i32, i32
  }
  func.func @transform_4(%arg0: i32) -> (i32, i32) {
    %c0_i32 = arith.constant 0 : i32
    %c0_i32_0 = arith.constant 0 : i32
    %c0_i32_1 = arith.constant 0 : i32
    return %c0_i32, %c0_i32_0 : i32, i32
  }
  func.func @transform_5(%arg0: i32) -> (i32, i32) {
    %c0_i32 = arith.constant 0 : i32
    %c0_i32_0 = arith.constant 0 : i32
    %c0_i32_1 = arith.constant 0 : i32
    return %c0_i32, %c0_i32_0 : i32, i32
  }
  func.func @transform_6(%arg0: i32) -> (i32, i32) {
    %c0_i32 = arith.constant 0 : i32
    %c0_i32_0 = arith.constant 0 : i32
    %c0_i32_1 = arith.constant 0 : i32
    return %c0_i32, %c0_i32_0 : i32, i32
  }
  func.func @transform_7(%arg0: i32) -> (i32, i32) {
    %c0_i32 = arith.constant 0 : i32
    %c0_i32_0 = arith.constant 0 : i32
    %c0_i32_1 = arith.constant 0 : i32
    return %c0_i32, %c0_i32_0 : i32, i32
  }
  func.func @transform_8(%arg0: i32) -> (i32, i32) {
    %c0_i32 = arith.constant 0 : i32
    %c0_i32_0 = arith.constant 0 : i32
    %c0_i32_1 = arith.constant 0 : i32
    return %c0_i32, %c0_i32_0 : i32, i32
  }
  func.func @transform_9(%arg0: i32) -> (i32, i32) {
    %c0_i32 = arith.constant 0 : i32
    %c0_i32_0 = arith.constant 0 : i32
    return %arg0, %c0_i32 : i32, i32
  }
  func.func @transform_10(%arg0: i32) -> (i32, i32) {
    %c0_i32 = arith.constant 0 : i32
    %c0_i32_0 = arith.constant 0 : i32
    return %arg0, %c0_i32 : i32, i32
  }
}

</mosaic_0001>

<llo_original>
// kernel: tpu_custom_call.1
$region0: #{tpu_custom_call.1}
  #allocation0 [shape = 'u32[]', space=smem, size = 0x4, offset = 0x4, fixed_abs, tag = 'smem constant byte address 0x4 - core index']
  #allocation1 [shape = 'u32[144,128]{1,0:T(1,128)}', space=vmem, size = 0x12000, scoped, tag = 'internal scratch']
  %s0 = inlined_call_operand.hbm [shape: f32[8,128], index: 0, kind: input, shape index: {}]
  %s1 = inlined_call_operand.hbm [shape: f32[128,128], index: 1, kind: input, shape index: {}]
  %s2 = inlined_call_operand.vmem [shape: f32[1,128], index: 2, kind: input, shape index: {}]
  %s3 = inlined_call_operand.hbm [shape: f32[128,128], index: 3, kind: input, shape index: {}]
  %s4 = inlined_call_operand.vmem [shape: f32[1,128], index: 4, kind: input, shape index: {}]
  %s5 = inlined_call_operand.hbm [shape: f32[128,128], index: 5, kind: input, shape index: {}]
  %s6 = inlined_call_operand.vmem [shape: f32[1,128], index: 6, kind: input, shape index: {}]
  %s7 = inlined_call_operand.hbm [shape: f32[128,128], index: 7, kind: input, shape index: {}]
  %s8 = inlined_call_operand.vmem [shape: f32[1,128], index: 8, kind: input, shape index: {}]
  %s9 = inlined_call_operand.hbm [shape: f32[8,128], index: 9, kind: output, shape index: {0}]
  %s10 = inlined_call_operand.hbm [shape: f32[8,128], index: 10, kind: output, shape index: {1}]
  %11 = xla_tuple %s9, %s10
  %s12 = sld [smem:[#allocation0]]
  $region74: #{tpu_custom_call.1} parent=0
    _
  %s14 = ssub.s32 1, %s12
  %s15 = scalar_select 0, %s14, %s12
  $region1: #{tpu_custom_call.1} parent=0
    #allocation2 [shape = 'u8[4096]{0}', space=vmem, size = 0x1000, scoped, tag = 'input window, operand 0, single buffered']
    #allocation3 [shape = 's32[1]{0}', space=sflag, size = 0x4, scoped, tag = 'scoped memory for tpu_custom_call.1']
    #allocation4 [shape = 's32[1]{0}', space=sflag, size = 0x4, scoped, tag = 'scoped memory for tpu_custom_call.1']
    #allocation5 [shape = 'u8[65536]{0}', space=vmem, size = 0x10000, scoped, tag = 'input window, operand 1, single buffered']
    #allocation6 [shape = 's32[1]{0}', space=sflag, size = 0x4, scoped, tag = 'scoped memory for tpu_custom_call.1']
    #allocation7 [shape = 'u8[65536]{0}', space=vmem, size = 0x10000, scoped, tag = 'input window, operand 3, single buffered']
    #allocation8 [shape = 'u8[65536]{0}', space=vmem, size = 0x10000, scoped, tag = 'input window, operand 5, single buffered']
    #allocation9 [shape = 's32[1]{0}', space=sflag, size = 0x4, scoped, tag = 'scoped memory for tpu_custom_call.1']
    #allocation10 [shape = 'u8[65536]{0}', space=vmem, size = 0x10000, scoped, tag = 'input window, operand 7, single buffered']
    #allocation11 [shape = 'u8[4096]{0}', space=vmem, size = 0x1000, scoped, tag = 'output window, operand 0, single buffered']
    #allocation12 [shape = 'u8[4096]{0}', space=vmem, size = 0x1000, scoped, tag = 'output window, operand 1, single buffered']
    #allocation13 [shape = 's32[1]{0}', space=sflag, size = 0x4, scoped, tag = 'scoped memory for tpu_custom_call.1']
    %16 = vsyncpa [#allocation3], 0
    %17 = vsyncpa [#allocation6], 0
    %18 = vsyncpa [#allocation9], 0
    %19 = vsyncpa [#allocation4], 0
    %20 = vsyncpa [#allocation13], 0
    // Predicated region
    $region2: #{tpu_custom_call.1} parent=1 // pred_check
      _
    $region3: #{tpu_custom_call.1} parent=1 // pred_check_branch
      %22 = sbr.rel (0) target = $region5
    $region4: #{tpu_custom_call.1} parent=1 // pred_region
      %s24 = ssub.s32 128, 128
      %25 = vsyncadd [#allocation3], %s24
      %s27 = sshll.u32 [#allocation2], 4
      %s28 = int_to_ptr.vmem [resolvable:$true] %s27
      %30 = dma.hbm_to_vmem [thread:$0]  %s0, 128, %s28, [#allocation3]
    $region5: #{tpu_custom_call.1} parent=1 // pred_fallthru
      _
    // Predicated region
    $region6: #{tpu_custom_call.1} parent=1 // pred_check
      _
    $region7: #{tpu_custom_call.1} parent=1 // pred_check_branch
      %32 = sbr.rel (0) target = $region9
    $region8: #{tpu_custom_call.1} parent=1 // pred_region
      %s34 = ssub.s32 2048, 2048
      %35 = vsyncadd [#allocation6], %s34
      %s36 = sshll.u32 [#allocation5], 4
      %s37 = int_to_ptr.vmem [resolvable:$true] %s36
      %42 = dma.hbm_to_vmem [thread:$0]  %s1, 2048, %s37, [#allocation6], 128, 128, 8
    $region9: #{tpu_custom_call.1} parent=1 // pred_fallthru
      _
    // Predicated region
    $region10: #{tpu_custom_call.1} parent=1 // pred_check
      _
    $region11: #{tpu_custom_call.1} parent=1 // pred_check_branch
      %44 = sbr.rel (0) target = $region13
    $region12: #{tpu_custom_call.1} parent=1 // pred_region
      _
    $region13: #{tpu_custom_call.1} parent=1 // pred_fallthru
      _
    // Predicated region
    $region14: #{tpu_custom_call.1} parent=1 // pred_check
      _
    $region15: #{tpu_custom_call.1} parent=1 // pred_check_branch
      %46 = sbr.rel (0) target = $region17
    $region16: #{tpu_custom_call.1} parent=1 // pred_region
      %s48 = ssub.s32 2048, 2048
      %49 = vsyncadd [#allocation6], %s48
      %s50 = sshll.u32 [#allocation7], 4
      %s51 = int_to_ptr.vmem [resolvable:$true] %s50
      %56 = dma.hbm_to_vmem [thread:$0]  %s3, 2048, %s51, [#allocation6], 128, 128, 8
    $region17: #{tpu_custom_call.1} parent=1 // pred_fallthru
      _
    // Predicated region
    $region18: #{tpu_custom_call.1} parent=1 // pred_check
      _
    $region19: #{tpu_custom_call.1} parent=1 // pred_check_branch
      %58 = sbr.rel (0) target = $region21
    $region20: #{tpu_custom_call.1} parent=1 // pred_region
      _
    $region21: #{tpu_custom_call.1} parent=1 // pred_fallthru
      _
    // Predicated region
    $region22: #{tpu_custom_call.1} parent=1 // pred_check
      _
    $region23: #{tpu_custom_call.1} parent=1 // pred_check_branch
      %60 = sbr.rel (0) target = $region25
    $region24: #{tpu_custom_call.1} parent=1 // pred_region
      %s62 = ssub.s32 2048, 2048
      %63 = vsyncadd [#allocation9], %s62
      %s64 = sshll.u32 [#allocation8], 4
      %s65 = int_to_ptr.vmem [resolvable:$true] %s64
      %70 = dma.hbm_to_vmem [thread:$0]  %s5, 2048, %s65, [#allocation9], 128, 128, 8
    $region25: #{tpu_custom_call.1} parent=1 // pred_fallthru
      _
    // Predicated region
    $region26: #{tpu_custom_call.1} parent=1 // pred_check
      _
    $region27: #{tpu_custom_call.1} parent=1 // pred_check_branch
      %72 = sbr.rel (0) target = $region29
    $region28: #{tpu_custom_call.1} parent=1 // pred_region
      _
    $region29: #{tpu_custom_call.1} parent=1 // pred_fallthru
      _
    // Predicated region
    $region30: #{tpu_custom_call.1} parent=1 // pred_check
      _
    $region31: #{tpu_custom_call.1} parent=1 // pred_check_branch
      %74 = sbr.rel (0) target = $region33
    $region32: #{tpu_custom_call.1} parent=1 // pred_region
      %s76 = ssub.s32 2048, 2048
      %77 = vsyncadd [#allocation9], %s76
      %s78 = sshll.u32 [#allocation10], 4
      %s79 = int_to_ptr.vmem [resolvable:$true] %s78
      %84 = dma.hbm_to_vmem [thread:$0]  %s7, 2048, %s79, [#allocation9], 128, 128, 8
    $region33: #{tpu_custom_call.1} parent=1 // pred_fallthru
      _
    // Predicated region
    $region34: #{tpu_custom_call.1} parent=1 // pred_check
      _
    $region35: #{tpu_custom_call.1} parent=1 // pred_check_branch
      %86 = sbr.rel (0) target = $region37
    $region36: #{tpu_custom_call.1} parent=1 // pred_region
      _
    $region37: #{tpu_custom_call.1} parent=1 // pred_fallthru
      _
    // Predicated region
    $region38: #{tpu_custom_call.1} parent=1 // pred_check
      _
    $region39: #{tpu_custom_call.1} parent=1 // pred_check_branch
      %88 = sbr.rel (0) target = $region41
    $region40: #{tpu_custom_call.1} parent=1 // pred_region
      %89 = dma.done [#allocation3], 128
    $region41: #{tpu_custom_call.1} parent=1 // pred_fallthru
      _
    // Predicated region
    $region42: #{tpu_custom_call.1} parent=1 // pred_check
      _
    $region43: #{tpu_custom_call.1} parent=1 // pred_check_branch
      %91 = sbr.rel (0) target = $region45
    $region44: #{tpu_custom_call.1} parent=1 // pred_region
      %92 = dma.done [#allocation6], 2048
    $region45: #{tpu_custom_call.1} parent=1 // pred_fallthru
      _
    // Predicated region
    $region46: #{tpu_custom_call.1} parent=1 // pred_check
      _
    $region47: #{tpu_custom_call.1} parent=1 // pred_check_branch
      %94 = sbr.rel (0) target = $region49
    $region48: #{tpu_custom_call.1} parent=1 // pred_region
      %95 = dma.done [#allocation6], 2048
    $region49: #{tpu_custom_call.1} parent=1 // pred_fallthru
      _
    // Predicated region
    $region50: #{tpu_custom_call.1} parent=1 // pred_check
      _
    $region51: #{tpu_custom_call.1} parent=1 // pred_check_branch
      %97 = sbr.rel (0) target = $region53
    $region52: #{tpu_custom_call.1} parent=1 // pred_region
      %98 = dma.done [#allocation9], 2048
    $region53: #{tpu_custom_call.1} parent=1 // pred_fallthru
      _
    // Predicated region
    $region54: #{tpu_custom_call.1} parent=1 // pred_check
      _
    $region55: #{tpu_custom_call.1} parent=1 // pred_check_branch
      %100 = sbr.rel (0) target = $region57
    $region56: #{tpu_custom_call.1} parent=1 // pred_region
      %101 = dma.done [#allocation9], 2048
    $region57: #{tpu_custom_call.1} parent=1 // pred_fallthru
      _
    %v102 = vld [vmem:[#allocation2] sm:$0xff]
    %v103 = vld [vmem:[#allocation5] sm:$0xff]
    %v104 = vld [vmem:[#allocation5 + $0x8] sm:$0xff]
    %v105 = vld [vmem:[#allocation5 + $0x10] sm:$0xff]
    %v106 = vld [vmem:[#allocation5 + $0x18] sm:$0xff]
    %v107 = vld [vmem:[#allocation5 + $0x20] sm:$0xff]
    %v108 = vld [vmem:[#allocation5 + $0x28] sm:$0xff]
    %v109 = vld [vmem:[#allocation5 + $0x30] sm:$0xff]
    %v110 = vld [vmem:[#allocation5 + $0x38] sm:$0xff]
    %v111 = vld [vmem:[#allocation5 + $0x40] sm:$0xff]
    %v112 = vld [vmem:[#allocation5 + $0x48] sm:$0xff]
    %v113 = vld [vmem:[#allocation5 + $0x50] sm:$0xff]
    %v114 = vld [vmem:[#allocation5 + $0x58] sm:$0xff]
    %v115 = vld [vmem:[#allocation5 + $0x60] sm:$0xff]
    %v116 = vld [vmem:[#allocation5 + $0x68] sm:$0xff]
    %v117 = vld [vmem:[#allocation5 + $0x70] sm:$0xff]
    %v118 = vld [vmem:[#allocation5 + $0x78] sm:$0xff]
    %v119 = vld [vmem:[%s2] sm:$0x1]
    %v121 = vlaneseq
    %v122 = vshrl.u32 %v121, 7
    %v123 = vsub.s32 0, %v122
    %v124 = vrot.slane %v119, %v123
    %126 = vmatprep.subr.mxu0 0.0
    %127 = vmatpush1.msra.mxu0 %v103
    %128 = vmatprep.subr.mxu0 0.0
    %129 = vmatpush1.msra.mxu0 %v104
    %130 = vmatprep.subr.mxu0 0.0
    %131 = vmatpush1.msra.mxu0 %v105
    %132 = vmatprep.subr.mxu0 0.0
    %133 = vmatpush1.msra.mxu0 %v106
    %134 = vmatprep.subr.mxu0 0.0
    %135 = vmatpush1.msra.mxu0 %v107
    %136 = vmatprep.subr.mxu0 0.0
    %137 = vmatpush1.msra.mxu0 %v108
    %138 = vmatprep.subr.mxu0 0.0
    %139 = vmatpush1.msra.mxu0 %v109
    %140 = vmatprep.subr.mxu0 0.0
    %141 = vmatpush1.msra.mxu0 %v110
    %142 = vmatprep.subr.mxu0 0.0
    %143 = vmatpush1.msra.mxu0 %v111
    %144 = vmatprep.subr.mxu0 0.0
    %145 = vmatpush1.msra.mxu0 %v112
    %146 = vmatprep.subr.mxu0 0.0
    %147 = vmatpush1.msra.mxu0 %v113
    %148 = vmatprep.subr.mxu0 0.0
    %149 = vmatpush1.msra.mxu0 %v114
    %150 = vmatprep.subr.mxu0 0.0
    %151 = vmatpush1.msra.mxu0 %v115
    %152 = vmatprep.subr.mxu0 0.0
    %153 = vmatpush1.msra.mxu0 %v116
    %154 = vmatprep.subr.mxu0 0.0
    %155 = vmatpush1.msra.mxu0 %v117
    %156 = vmatprep.subr.mxu0 0.0
    %157 = vmatpush1.msra.mxu0 %v118
    %158 = vmatprep.subr.mxu0 0.0
    %159 = vmatpush1.msra.mxu0 0.0
    %160 = vmatprep.subr.mxu0 0.0
    %161 = vmatpush1.msra.mxu0 0.0
    %162 = vmatprep.subr.mxu0 0.0
    %163 = vmatpush1.msra.mxu0 0.0
    %164 = vmatprep.subr.mxu0 0.0
    %165 = vmatpush1.msra.mxu0 0.0
    %166 = vmatprep.subr.mxu0 0.0
    %167 = vmatpush1.msra.mxu0 0.0
    %168 = vmatprep.subr.mxu0 0.0
    %169 = vmatpush1.msra.mxu0 0.0
    %170 = vmatprep.subr.mxu0 0.0
    %171 = vmatpush1.msra.mxu0 0.0
    %172 = vmatprep.subr.mxu0 0.0
    %173 = vmatpush1.msra.mxu0 0.0
    %174 = vmatprep.subr.mxu0 0.0
    %175 = vmatpush1.msra.mxu0 0.0
    %176 = vmatprep.subr.mxu0 0.0
    %177 = vmatpush1.msra.mxu0 0.0
    %178 = vmatprep.subr.mxu0 0.0
    %179 = vmatpush1.msra.mxu0 0.0
    %180 = vmatprep.subr.mxu0 0.0
    %181 = vmatpush1.msra.mxu0 0.0
    %182 = vmatprep.subr.mxu0 0.0
    %183 = vmatpush1.msra.mxu0 0.0
    %184 = vmatprep.subr.mxu0 0.0
    %185 = vmatpush1.msra.mxu0 0.0
    %186 = vmatprep.subr.mxu0 0.0
    %187 = vmatpush1.msra.mxu0 0.0
    %188 = vmatprep.subr.mxu0 0.0
    %189 = vmatpush1.msra.mxu0 0.0
    %190 = vmatprep.mubr.f32.mxu0 0.0
    %191 = vmatmul.mubr.f32.gmra.mrb[0].mxu0 %v102
    %v192 = vpop.f32.mrb[0].mxu0
    %v193 = vadd.f32 %v124, %v192
    %v194 = vpop.f32.mrb[0].mxu0
    %195 = vdwg.mxu0
    %v196 = vmax.f32 %v193, 0.0
    %v197 = vld [vmem:[#allocation7] sm:$0xff]
    %v198 = vld [vmem:[#allocation7 + $0x8] sm:$0xff]
    %v199 = vld [vmem:[#allocation7 + $0x10] sm:$0xff]
    %v200 = vld [vmem:[#allocation7 + $0x18] sm:$0xff]
    %v201 = vld [vmem:[#allocation7 + $0x20] sm:$0xff]
    %v202 = vld [vmem:[#allocation7 + $0x28] sm:$0xff]
    %v203 = vld [vmem:[#allocation7 + $0x30] sm:$0xff]
    %v204 = vld [vmem:[#allocation7 + $0x38] sm:$0xff]
    %v205 = vld [vmem:[#allocation7 + $0x40] sm:$0xff]
    %v206 = vld [vmem:[#allocation7 + $0x48] sm:$0xff]
    %v207 = vld [vmem:[#allocation7 + $0x50] sm:$0xff]
    %v208 = vld [vmem:[#allocation7 + $0x58] sm:$0xff]
    %v209 = vld [vmem:[#allocation7 + $0x60] sm:$0xff]
    %v210 = vld [vmem:[#allocation7 + $0x68] sm:$0xff]
    %v211 = vld [vmem:[#allocation7 + $0x70] sm:$0xff]
    %v212 = vld [vmem:[#allocation7 + $0x78] sm:$0xff]
    %v213 = vld [vmem:[%s4] sm:$0x1]
    %v215 = vlaneseq
    %v216 = vshrl.u32 %v215, 7
    %v217 = vsub.s32 0, %v216
    %v218 = vrot.slane %v213, %v217
    %220 = vmatprep.subr.mxu0 0.0
    %221 = vmatpush1.msra.mxu0 %v197
    %222 = vmatprep.subr.mxu0 0.0
    %223 = vmatpush1.msra.mxu0 %v198
    %224 = vmatprep.subr.mxu0 0.0
    %225 = vmatpush1.msra.mxu0 %v199
    %226 = vmatprep.subr.mxu0 0.0
    %227 = vmatpush1.msra.mxu0 %v200
    %228 = vmatprep.subr.mxu0 0.0
    %229 = vmatpush1.msra.mxu0 %v201
    %230 = vmatprep.subr.mxu0 0.0
    %231 = vmatpush1.msra.mxu0 %v202
    %232 = vmatprep.subr.mxu0 0.0
    %233 = vmatpush1.msra.mxu0 %v203
    %234 = vmatprep.subr.mxu0 0.0
    %235 = vmatpush1.msra.mxu0 %v204
    %236 = vmatprep.subr.mxu0 0.0
    %237 = vmatpush1.msra.mxu0 %v205
    %238 = vmatprep.subr.mxu0 0.0
    %239 = vmatpush1.msra.mxu0 %v206
    %240 = vmatprep.subr.mxu0 0.0
    %241 = vmatpush1.msra.mxu0 %v207
    %242 = vmatprep.subr.mxu0 0.0
    %243 = vmatpush1.msra.mxu0 %v208
    %244 = vmatprep.subr.mxu0 0.0
    %245 = vmatpush1.msra.mxu0 %v209
    %246 = vmatprep.subr.mxu0 0.0
    %247 = vmatpush1.msra.mxu0 %v210
    %248 = vmatprep.subr.mxu0 0.0
    %249 = vmatpush1.msra.mxu0 %v211
    %250 = vmatprep.subr.mxu0 0.0
    %251 = vmatpush1.msra.mxu0 %v212
    %252 = vmatprep.subr.mxu0 0.0
    %253 = vmatpush1.msra.mxu0 0.0
    %254 = vmatprep.subr.mxu0 0.0
    %255 = vmatpush1.msra.mxu0 0.0
    %256 = vmatprep.subr.mxu0 0.0
    %257 = vmatpush1.msra.mxu0 0.0
    %258 = vmatprep.subr.mxu0 0.0
    %259 = vmatpush1.msra.mxu0 0.0
    %260 = vmatprep.subr.mxu0 0.0
    %261 = vmatpush1.msra.mxu0 0.0
    %262 = vmatprep.subr.mxu0 0.0
    %263 = vmatpush1.msra.mxu0 0.0
    %264 = vmatprep.subr.mxu0 0.0
    %265 = vmatpush1.msra.mxu0 0.0
    %266 = vmatprep.subr.mxu0 0.0
    %267 = vmatpush1.msra.mxu0 0.0
    %268 = vmatprep.subr.mxu0 0.0
    %269 = vmatpush1.msra.mxu0 0.0
    %270 = vmatprep.subr.mxu0 0.0
    %271 = vmatpush1.msra.mxu0 0.0
    %272 = vmatprep.subr.mxu0 0.0
    %273 = vmatpush1.msra.mxu0 0.0
    %274 = vmatprep.subr.mxu0 0.0
    %275 = vmatpush1.msra.mxu0 0.0
    %276 = vmatprep.subr.mxu0 0.0
    %277 = vmatpush1.msra.mxu0 0.0
    %278 = vmatprep.subr.mxu0 0.0
    %279 = vmatpush1.msra.mxu0 0.0
    %280 = vmatprep.subr.mxu0 0.0
    %281 = vmatpush1.msra.mxu0 0.0
    %282 = vmatprep.subr.mxu0 0.0
    %283 = vmatpush1.msra.mxu0 0.0
    %284 = vmatprep.mubr.f32.mxu0 0.0
    %285 = vmatmul.mubr.f32.gmra.mrb[0].mxu0 %v196
    %v286 = vpop.f32.mrb[0].mxu0
    %v287 = vadd.f32 %v218, %v286
    %v288 = vpop.f32.mrb[0].mxu0
    %289 = vdwg.mxu0
    %vm290 = vcmp.gt.f32.partialorder %v287, 0.0
    %v291 = vsel %vm290, 1, 0
    %v292 = vcvt.s32.f32 %v291
    %293 = vst [vmem:[#allocation12] sm:$0xff] %v292
    %v294 = vld [vmem:[#allocation8] sm:$0xff]
    %v295 = vld [vmem:[#allocation8 + $0x8] sm:$0xff]
    %v296 = vld [vmem:[#allocation8 + $0x10] sm:$0xff]
    %v297 = vld [vmem:[#allocation8 + $0x18] sm:$0xff]
    %v298 = vld [vmem:[#allocation8 + $0x20] sm:$0xff]
    %v299 = vld [vmem:[#allocation8 + $0x28] sm:$0xff]
    %v300 = vld [vmem:[#allocation8 + $0x30] sm:$0xff]
    %v301 = vld [vmem:[#allocation8 + $0x38] sm:$0xff]
    %v302 = vld [vmem:[#allocation8 + $0x40] sm:$0xff]
    %v303 = vld [vmem:[#allocation8 + $0x48] sm:$0xff]
    %v304 = vld [vmem:[#allocation8 + $0x50] sm:$0xff]
    %v305 = vld [vmem:[#allocation8 + $0x58] sm:$0xff]
    %v306 = vld [vmem:[#allocation8 + $0x60] sm:$0xff]
    %v307 = vld [vmem:[#allocation8 + $0x68] sm:$0xff]
    %v308 = vld [vmem:[#allocation8 + $0x70] sm:$0xff]
    %v309 = vld [vmem:[#allocation8 + $0x78] sm:$0xff]
    %v310 = vld [vmem:[%s6] sm:$0x1]
    %v312 = vlaneseq
    %v313 = vshrl.u32 %v312, 7
    %v314 = vsub.s32 0, %v313
    %v315 = vrot.slane %v310, %v314
    %317 = vmatprep.subr.mxu0 0.0
    %318 = vmatpush1.msra.mxu0 %v294
    %319 = vmatprep.subr.mxu0 0.0
    %320 = vmatpush1.msra.mxu0 %v295
    %321 = vmatprep.subr.mxu0 0.0
    %322 = vmatpush1.msra.mxu0 %v296
    %323 = vmatprep.subr.mxu0 0.0
    %324 = vmatpush1.msra.mxu0 %v297
    %325 = vmatprep.subr.mxu0 0.0
    %326 = vmatpush1.msra.mxu0 %v298
    %327 = vmatprep.subr.mxu0 0.0
    %328 = vmatpush1.msra.mxu0 %v299
    %329 = vmatprep.subr.mxu0 0.0
    %330 = vmatpush1.msra.mxu0 %v300
    %331 = vmatprep.subr.mxu0 0.0
    %332 = vmatpush1.msra.mxu0 %v301
    %333 = vmatprep.subr.mxu0 0.0
    %334 = vmatpush1.msra.mxu0 %v302
    %335 = vmatprep.subr.mxu0 0.0
    %336 = vmatpush1.msra.mxu0 %v303
    %337 = vmatprep.subr.mxu0 0.0
    %338 = vmatpush1.msra.mxu0 %v304
    %339 = vmatprep.subr.mxu0 0.0
    %340 = vmatpush1.msra.mxu0 %v305
    %341 = vmatprep.subr.mxu0 0.0
    %342 = vmatpush1.msra.mxu0 %v306
    %343 = vmatprep.subr.mxu0 0.0
    %344 = vmatpush1.msra.mxu0 %v307
    %345 = vmatprep.subr.mxu0 0.0
    %346 = vmatpush1.msra.mxu0 %v308
    %347 = vmatprep.subr.mxu0 0.0
    %348 = vmatpush1.msra.mxu0 %v309
    %349 = vmatprep.subr.mxu0 0.0
    %350 = vmatpush1.msra.mxu0 0.0
    %351 = vmatprep.subr.mxu0 0.0
    %352 = vmatpush1.msra.mxu0 0.0
    %353 = vmatprep.subr.mxu0 0.0
    %354 = vmatpush1.msra.mxu0 0.0
    %355 = vmatprep.subr.mxu0 0.0
    %356 = vmatpush1.msra.mxu0 0.0
    %357 = vmatprep.subr.mxu0 0.0
    %358 = vmatpush1.msra.mxu0 0.0
    %359 = vmatprep.subr.mxu0 0.0
    %360 = vmatpush1.msra.mxu0 0.0
    %361 = vmatprep.subr.mxu0 0.0
    %362 = vmatpush1.msra.mxu0 0.0
    %363 = vmatprep.subr.mxu0 0.0
    %364 = vmatpush1.msra.mxu0 0.0
    %365 = vmatprep.subr.mxu0 0.0
    %366 = vmatpush1.msra.mxu0 0.0
    %367 = vmatprep.subr.mxu0 0.0
    %368 = vmatpush1.msra.mxu0 0.0
    %369 = vmatprep.subr.mxu0 0.0
    %370 = vmatpush1.msra.mxu0 0.0
    %371 = vmatprep.subr.mxu0 0.0
    %372 = vmatpush1.msra.mxu0 0.0
    %373 = vmatprep.subr.mxu0 0.0
    %374 = vmatpush1.msra.mxu0 0.0
    %375 = vmatprep.subr.mxu0 0.0
    %376 = vmatpush1.msra.mxu0 0.0
    %377 = vmatprep.subr.mxu0 0.0
    %378 = vmatpush1.msra.mxu0 0.0
    %379 = vmatprep.subr.mxu0 0.0
    %380 = vmatpush1.msra.mxu0 0.0
    %381 = vmatprep.mubr.f32.mxu0 0.0
    %382 = vmatmul.mubr.f32.gmra.mrb[0].mxu0 %v292
    %v383 = vpop.f32.mrb[0].mxu0
    %v384 = vadd.f32 %v315, %v383
    %v385 = vpop.f32.mrb[0].mxu0
    %386 = vdwg.mxu0
    %v387 = vmax.f32 %v384, 0.0
    %v388 = vld [vmem:[#allocation10] sm:$0xff]
    %v389 = vld [vmem:[#allocation10 + $0x8] sm:$0xff]
    %v390 = vld [vmem:[#allocation10 + $0x10] sm:$0xff]
    %v391 = vld [vmem:[#allocation10 + $0x18] sm:$0xff]
    %v392 = vld [vmem:[#allocation10 + $0x20] sm:$0xff]
    %v393 = vld [vmem:[#allocation10 + $0x28] sm:$0xff]
    %v394 = vld [vmem:[#allocation10 + $0x30] sm:$0xff]
    %v395 = vld [vmem:[#allocation10 + $0x38] sm:$0xff]
    %v396 = vld [vmem:[#allocation10 + $0x40] sm:$0xff]
    %v397 = vld [vmem:[#allocation10 + $0x48] sm:$0xff]
    %v398 = vld [vmem:[#allocation10 + $0x50] sm:$0xff]
    %v399 = vld [vmem:[#allocation10 + $0x58] sm:$0xff]
    %v400 = vld [vmem:[#allocation10 + $0x60] sm:$0xff]
    %v401 = vld [vmem:[#allocation10 + $0x68] sm:$0xff]
    %v402 = vld [vmem:[#allocation10 + $0x70] sm:$0xff]
    %v403 = vld [vmem:[#allocation10 + $0x78] sm:$0xff]
    %v404 = vld [vmem:[%s8] sm:$0x1]
    %v406 = vlaneseq
    %v407 = vshrl.u32 %v406, 7
    %v408 = vsub.s32 0, %v407
    %v409 = vrot.slane %v404, %v408
    %411 = vmatprep.subr.mxu0 0.0
    %412 = vmatpush1.msra.mxu0 %v388
    %413 = vmatprep.subr.mxu0 0.0
    %414 = vmatpush1.msra.mxu0 %v389
    %415 = vmatprep.subr.mxu0 0.0
    %416 = vmatpush1.msra.mxu0 %v390
    %417 = vmatprep.subr.mxu0 0.0
    %418 = vmatpush1.msra.mxu0 %v391
    %419 = vmatprep.subr.mxu0 0.0
    %420 = vmatpush1.msra.mxu0 %v392
    %421 = vmatprep.subr.mxu0 0.0
    %422 = vmatpush1.msra.mxu0 %v393
    %423 = vmatprep.subr.mxu0 0.0
    %424 = vmatpush1.msra.mxu0 %v394
    %425 = vmatprep.subr.mxu0 0.0
    %426 = vmatpush1.msra.mxu0 %v395
    %427 = vmatprep.subr.mxu0 0.0
    %428 = vmatpush1.msra.mxu0 %v396
    %429 = vmatprep.subr.mxu0 0.0
    %430 = vmatpush1.msra.mxu0 %v397
    %431 = vmatprep.subr.mxu0 0.0
    %432 = vmatpush1.msra.mxu0 %v398
    %433 = vmatprep.subr.mxu0 0.0
    %434 = vmatpush1.msra.mxu0 %v399
    %435 = vmatprep.subr.mxu0 0.0
    %436 = vmatpush1.msra.mxu0 %v400
    %437 = vmatprep.subr.mxu0 0.0
    %438 = vmatpush1.msra.mxu0 %v401
    %439 = vmatprep.subr.mxu0 0.0
    %440 = vmatpush1.msra.mxu0 %v402
    %441 = vmatprep.subr.mxu0 0.0
    %442 = vmatpush1.msra.mxu0 %v403
    %443 = vmatprep.subr.mxu0 0.0
    %444 = vmatpush1.msra.mxu0 0.0
    %445 = vmatprep.subr.mxu0 0.0
    %446 = vmatpush1.msra.mxu0 0.0
    %447 = vmatprep.subr.mxu0 0.0
    %448 = vmatpush1.msra.mxu0 0.0
    %449 = vmatprep.subr.mxu0 0.0
    %450 = vmatpush1.msra.mxu0 0.0
    %451 = vmatprep.subr.mxu0 0.0
    %452 = vmatpush1.msra.mxu0 0.0
    %453 = vmatprep.subr.mxu0 0.0
    %454 = vmatpush1.msra.mxu0 0.0
    %455 = vmatprep.subr.mxu0 0.0
    %456 = vmatpush1.msra.mxu0 0.0
    %457 = vmatprep.subr.mxu0 0.0
    %458 = vmatpush1.msra.mxu0 0.0
    %459 = vmatprep.subr.mxu0 0.0
    %460 = vmatpush1.msra.mxu0 0.0
    %461 = vmatprep.subr.mxu0 0.0
    %462 = vmatpush1.msra.mxu0 0.0
    %463 = vmatprep.subr.mxu0 0.0
    %464 = vmatpush1.msra.mxu0 0.0
    %465 = vmatprep.subr.mxu0 0.0
    %466 = vmatpush1.msra.mxu0 0.0
    %467 = vmatprep.subr.mxu0 0.0
    %468 = vmatpush1.msra.mxu0 0.0
    %469 = vmatprep.subr.mxu0 0.0
    %470 = vmatpush1.msra.mxu0 0.0
    %471 = vmatprep.subr.mxu0 0.0
    %472 = vmatpush1.msra.mxu0 0.0
    %473 = vmatprep.subr.mxu0 0.0
    %474 = vmatpush1.msra.mxu0 0.0
    %475 = vmatprep.mubr.f32.mxu0 0.0
    %476 = vmatmul.mubr.f32.gmra.mrb[0].mxu0 %v387
    %v477 = vpop.f32.mrb[0].mxu0
    %v478 = vadd.f32 %v409, %v477
    %v479 = vpop.f32.mrb[0].mxu0
    %480 = vdwg.mxu0
    %v481 = vand.u32 2147483647, %v478
    %v482 = vsub.f32 0.0, %v481
    %v483 = vmul.f32 %v482, 1.442695
    %v484 = vpow.pop %v483
    %vm485 = vcmp.ge.f32.partialorder %v478, 0.0
    %v486 = vadd.f32 %v484, 1.0
    %v487 = vrcp.pop %v486
    %v488 = vmul.f32 1.0, %v487
    %v489 = vmul.f32 %v484, %v487
    %v490 = vsel %vm485, %v488, %v489
    %491 = vst [vmem:[#allocation11] sm:$0xff] %v490
    // Predicated region
    $region58: #{tpu_custom_call.1} parent=1 // pred_check
      _
    $region59: #{tpu_custom_call.1} parent=1 // pred_check_branch
      %493 = sbr.rel (0) target = $region61
    $region60: #{tpu_custom_call.1} parent=1 // pred_region
      %s495 = ssub.s32 128, 128
      %496 = vsyncadd [#allocation4], %s495
      %s498 = sshll.u32 [#allocation11], 4
      %s499 = int_to_ptr.vmem [resolvable:$true] %s498
      %501 = dma.vmem_to_hbm [thread:$0]  %s499, 128, %s9, [#allocation4]
    $region61: #{tpu_custom_call.1} parent=1 // pred_fallthru
      _
    // Predicated region
    $region62: #{tpu_custom_call.1} parent=1 // pred_check
      _
    $region63: #{tpu_custom_call.1} parent=1 // pred_check_branch
      %503 = sbr.rel (0) target = $region65
    $region64: #{tpu_custom_call.1} parent=1 // pred_region
      %s505 = ssub.s32 128, 128
      %506 = vsyncadd [#allocation13], %s505
      %s508 = sshll.u32 [#allocation12], 4
      %s509 = int_to_ptr.vmem [resolvable:$true] %s508
      %511 = dma.vmem_to_hbm [thread:$0]  %s509, 128, %s10, [#allocation13]
    $region65: #{tpu_custom_call.1} parent=1 // pred_fallthru
      _
    // Predicated region
    $region66: #{tpu_custom_call.1} parent=1 // pred_check
      _
    $region67: #{tpu_custom_call.1} parent=1 // pred_check_branch
      %513 = sbr.rel (0) target = $region69
    $region68: #{tpu_custom_call.1} parent=1 // pred_region
      %514 = dma.done [#allocation4], 128
    $region69: #{tpu_custom_call.1} parent=1 // pred_fallthru
      _
    // Predicated region
    $region70: #{tpu_custom_call.1} parent=1 // pred_check
      _
    $region71: #{tpu_custom_call.1} parent=1 // pred_check_branch
      %516 = sbr.rel (0) target = $region73
    $region72: #{tpu_custom_call.1} parent=1 // pred_region
      %517 = dma.done [#allocation13], 128
    $region73: #{tpu_custom_call.1} parent=1 // pred_fallthru
      _
    %518 = vsyncpa [#allocation3], 1
    %519 = vsyncpa [#allocation6], 1
    %520 = vsyncpa [#allocation9], 1
    %521 = vsyncpa [#allocation4], 1
    %522 = vsyncpa [#allocation13], 1

</llo_original>
